<compile_context>
chip_gen: v7x
topology: tpu7x:2x2x1
jax: 0.10.0
libtpu: 0.0.40
codegen_flags: <defaults>
</compile_context>

<pallas_src>
import jax
import jax.numpy as jnp
import numpy as np
from jax.experimental import pallas as pl
from jax.experimental.pallas import tpu as pltpu

_LANES = 128


def _round_up(x, m):
    return ((x + m - 1) // m) * m


def tmf_fast_kernel(wb_ref, u_ref, v_ref, t_ref, out_ref):
    # u_ref, v_ref: [TB, E] f32 (rows on sublanes, embedding dim on lanes)
    # t_ref, out_ref: [TB, 1] f32
    # wb_ref: (2,) f32 in SMEM -> [w, b] of the Linear(1, 1)
    prod = u_ref[...] * v_ref[...]                                 # VPU, [TB, E]
    r_ui = jnp.sum(prod, axis=-1, keepdims=True)                   # lane reduce, [TB, 1]
    # f_{u,i,t} = w * (r_ui * itemage) + b ; sigmoid because loss_type == 'NLL'.
    f_uit = wb_ref[0] * (r_ui * t_ref[...]) + wb_ref[1]            # [TB, 1]
    out_ref[...] = jax.nn.sigmoid(f_uit)


def tmf_fast_forward(params, user, item, itemage, *, block_rows=2048):
    """Plain-JAX glue: embedding gathers + batch padding; Pallas kernel: the math."""
    user_emb = params["user_emb"]
    item_emb = params["item_emb"]
    E = user_emb.shape[-1]
    B = user.shape[0]

    # Batch tile: multiple of 128, clipped for tiny batches.
    b128 = max(_LANES, _round_up(B, _LANES))
    tb = min(block_rows, b128)
    # v7x megacore guard: keep >= 2 grid tiles (when the batch allows it) so
    # dimension_semantics=("parallel",) can shard the grid across the 2 TensorCores.
    if b128 >= 2 * _LANES:
        tb = min(tb, max(_LANES, (b128 // 2) // _LANES * _LANES))
    tb = max(_LANES, (tb // _LANES) * _LANES)

    n_tiles = (B + tb - 1) // tb
    B_pad = n_tiles * tb
    pad = B_pad - B

    user_p = jnp.pad(user, (0, pad)) if pad else user          # pads with index 0 (valid row)
    item_p = jnp.pad(item, (0, pad)) if pad else item
    age_p = jnp.pad(itemage, (0, pad)) if pad else itemage

    user_e = user_emb[user_p]                                  # [B_pad, E] f32
    item_e = item_emb[item_p]                                  # [B_pad, E] f32
    age = age_p.astype(jnp.float32).reshape(B_pad, 1)          # [B_pad, 1] f32

    # Linear(1,1) parameters as two SMEM scalars.
    wb = jnp.concatenate(
        [params["w"].reshape(-1), params["b_dense"].reshape(-1)]
    ).astype(jnp.float32)                                      # (2,)

    flops = 2 * B_pad * E + 3 * B_pad
    bytes_accessed = 2 * B_pad * E * 4 + 2 * B_pad * 4 + 8

    out = pl.pallas_call(
        tmf_fast_kernel,
        out_shape=jax.ShapeDtypeStruct((B_pad, 1), jnp.float32),
        grid=(n_tiles,),
        in_specs=[
            pl.BlockSpec(memory_space=pltpu.SMEM),               # [w, b] scalars
            pl.BlockSpec((tb, E), lambda i: (i, 0)),             # user rows (E = full dim)
            pl.BlockSpec((tb, E), lambda i: (i, 0)),             # item rows
            pl.BlockSpec((tb, 1), lambda i: (i, 0)),             # itemage column
        ],
        out_specs=pl.BlockSpec((tb, 1), lambda i: (i, 0)),
        compiler_params=pltpu.CompilerParams(
            dimension_semantics=("parallel",),                   # shard tiles across TCs (v7x)
        ),
        cost_estimate=pl.CostEstimate(
            flops=flops, transcendentals=B_pad, bytes_accessed=bytes_accessed
        ),
    )(wb, user_e, item_e, age)

    return out.reshape(-1)[:B]                                   # [B], matches torch .squeeze()


def init_params(key, n_users, n_items, embedding_size):
    """Deterministic xavier_normal-style init matching TMF_fast._init_weights."""
    def xavier_normal(k, shape):
        fan_out, fan_in = shape
        std = np.sqrt(2.0 / (fan_in + fan_out))
        return jax.random.normal(k, shape, dtype=jnp.float32) * std

    ks = jax.random.split(key, 3)
    return {
        "user_emb": xavier_normal(ks[0], (n_users, embedding_size)),
        "item_emb": xavier_normal(ks[1], (n_items, embedding_size)),
        # nn.Linear(1, 1): xavier_normal_(weight) (std=1 for a (1,1) weight), bias = 0.
        "w": xavier_normal(ks[2], (1, 1)),
        "b_dense": jnp.zeros((1,), dtype=jnp.float32),
    }


def reference_forward(params, user, item, itemage):
    user_e = params["user_emb"][user]
    item_e = params["item_emb"][item]
    r_ui = jnp.sum(user_e * item_e, axis=-1)
    f = params["w"][0, 0] * (r_ui * itemage.astype(jnp.float32)) + params["b_dense"][0]
    return jax.nn.sigmoid(f)


if __name__ == "__main__":
    key = jax.random.PRNGKey(0)
    n_users, n_items, n_periods, embedding_size = 10, 12, 6, 32
    batch = 8

    pkey, ukey, ikey, tkey = jax.random.split(key, 4)
    params = init_params(pkey, n_users, n_items, embedding_size)

    user = jax.random.randint(ukey, (batch,), 0, n_users, dtype=jnp.int32)
    item = jax.random.randint(ikey, (batch,), 0, n_items, dtype=jnp.int32)
    itemage = jax.random.randint(tkey, (batch,), 0, n_periods, dtype=jnp.int32)

    fwd = jax.jit(tmf_fast_forward)
    out = jax.block_until_ready(fwd(params, user, item, itemage))

    ref = reference_forward(params, user, item, itemage)
    np.testing.assert_allclose(np.asarray(out), np.asarray(ref), rtol=1e-5, atol=1e-5)

    print("KERNEL_OK")
</pallas_src>

<mosaic_0001>
module attributes {stable_mosaic.version = 11 : i64} {
  func.func @tmf_fast_kernel(%arg0: i32, %arg1: memref<2xf32, #tpu.memory_space<smem>>, %arg2: memref<128x32xf32, #tpu.memory_space<vmem>>, %arg3: memref<128x32xf32, #tpu.memory_space<vmem>>, %arg4: memref<128x1xf32, #tpu.memory_space<vmem>>, %arg5: memref<128x1xf32, #tpu.memory_space<vmem>>) attributes {dimension_semantics = [#tpu.dimension_semantics<parallel>], iteration_bounds = array<i64: 1>, scalar_prefetch = 0 : i64, scratch_operands = 0 : i64, tpu.core_type = #tpu.core_type<tc>, window_params = [{transform_indices = @transform_0, window_bounds = array<i64: 2>}, {transform_indices = @transform_1, window_bounds = array<i64: 128, 32>}, {transform_indices = @transform_2, window_bounds = array<i64: 128, 32>}, {transform_indices = @transform_3, window_bounds = array<i64: 128, 1>}, {transform_indices = @transform_4, window_bounds = array<i64: 128, 1>}]} {
    %c0 = arith.constant 0 : index
    %c0_0 = arith.constant 0 : index
    %0 = vector.load %arg2[%c0, %c0_0] : memref<128x32xf32, #tpu.memory_space<vmem>>, vector<128x32xf32>
    %c0_1 = arith.constant 0 : index
    %c0_2 = arith.constant 0 : index
    %1 = vector.load %arg3[%c0_1, %c0_2] : memref<128x32xf32, #tpu.memory_space<vmem>>, vector<128x32xf32>
    %2 = arith.mulf %0, %1 : vector<128x32xf32>
    %cst = arith.constant dense<0.000000e+00> : vector<128xf32>
    %3 = vector.multi_reduction <add>, %2, %cst [1] : vector<128x32xf32> to vector<128xf32>
    %4 = vector.shape_cast %3 : vector<128xf32> to vector<128x1xf32>
    %c0_3 = arith.constant 0 : index
    %5 = memref.load %arg1[%c0_3] : memref<2xf32, #tpu.memory_space<smem>>
    %c0_4 = arith.constant 0 : index
    %c0_5 = arith.constant 0 : index
    %6 = vector.load %arg4[%c0_4, %c0_5] : memref<128x1xf32, #tpu.memory_space<vmem>>, vector<128x1xf32>
    %7 = arith.mulf %4, %6 : vector<128x1xf32>
    %8 = vector.broadcast %5 : f32 to vector<128x1xf32>
    %9 = arith.mulf %8, %7 : vector<128x1xf32>
    %c1 = arith.constant 1 : index
    %10 = memref.load %arg1[%c1] : memref<2xf32, #tpu.memory_space<smem>>
    %11 = vector.broadcast %10 : f32 to vector<128x1xf32>
    %12 = arith.addf %9, %11 : vector<128x1xf32>
    %13 = arith.negf %12 : vector<128x1xf32>
    %14 = math.exp %13 : vector<128x1xf32>
    %cst_6 = arith.constant 1.000000e+00 : f32
    %15 = vector.broadcast %cst_6 : f32 to vector<128x1xf32>
    %16 = arith.addf %15, %14 : vector<128x1xf32>
    %17 = arith.divf %15, %16 : vector<128x1xf32>
    %c0_7 = arith.constant 0 : index
    %c0_8 = arith.constant 0 : index
    %18 = vector.load %arg5[%c0_7, %c0_8] : memref<128x1xf32, #tpu.memory_space<vmem>>, vector<128x1xf32>
    tpu.vector_store %arg5[%c0_7, %c0_8], %17 {strides = array<i32>} : memref<128x1xf32, #tpu.memory_space<vmem>>, vector<128x1xf32>,
    return
  }
  func.func @transform_0(%arg0: i32) -> i32 {
    %c0_i32 = arith.constant 0 : i32
    %c0_i32_0 = arith.constant 0 : i32
    return %c0_i32 : i32
  }
  func.func @transform_1(%arg0: i32) -> (i32, i32) {
    %c0_i32 = arith.constant 0 : i32
    %c0_i32_0 = arith.constant 0 : i32
    return %arg0, %c0_i32 : i32, i32
  }
  func.func @transform_2(%arg0: i32) -> (i32, i32) {
    %c0_i32 = arith.constant 0 : i32
    %c0_i32_0 = arith.constant 0 : i32
    return %arg0, %c0_i32 : i32, i32
  }
  func.func @transform_3(%arg0: i32) -> (i32, i32) {
    %c0_i32 = arith.constant 0 : i32
    %c0_i32_0 = arith.constant 0 : i32
    return %arg0, %c0_i32 : i32, i32
  }
  func.func @transform_4(%arg0: i32) -> (i32, i32) {
    %c0_i32 = arith.constant 0 : i32
    %c0_i32_0 = arith.constant 0 : i32
    return %arg0, %c0_i32 : i32, i32
  }
}

</mosaic_0001>

<llo_original>
// kernel: tmf_fast_forward.1
$region0: #{tmf_fast_forward.1}
  #allocation0 [shape = 'u32[]', space=smem, size = 0x4, offset = 0x4, fixed_abs, tag = 'smem constant byte address 0x4 - core index']
  #allocation1 [shape = 'u32[144,128]{1,0:T(1,128)}', space=vmem, size = 0x12000, scoped, tag = 'internal scratch']
  %s0 = inlined_call_operand.vmem [shape: f32[2], index: 0, kind: input, shape index: {}]
  %s1 = inlined_call_operand.vmem [shape: f32[128,32], index: 1, kind: input, shape index: {}]
  %s2 = inlined_call_operand.vmem [shape: f32[128,32], index: 2, kind: input, shape index: {}]
  %s3 = inlined_call_operand.vmem [shape: f32[128,1], index: 3, kind: input, shape index: {}]
  %s4 = inlined_call_operand.vmem [shape: f32[128,1], index: 4, kind: output, shape index: {}]
  %s5 = sld [smem:[#allocation0]]
  $region30: #{tmf_fast_forward.1} parent=0
    _
  %s7 = ssub.s32 1, %s5
  %s8 = scalar_select 0, %s7, %s5
  $region1: #{tmf_fast_forward.1} parent=0
    #allocation2 [shape = 'u8[512]{0}', space=smem, size = 0x200, scoped, tag = 'input window, operand 0, single buffered']
    #allocation3 [shape = 's32[1]{0}', space=sflag, size = 0x4, scoped, tag = 'scoped memory for tmf_fast_forward.1']
    %9 = vsyncpa [#allocation3], 0
    // Predicated region
    $region2: #{tmf_fast_forward.1} parent=1 // pred_check
      _
    $region3: #{tmf_fast_forward.1} parent=1 // pred_check_branch
      %11 = sbr.rel (0) target = $region5
    $region4: #{tmf_fast_forward.1} parent=1 // pred_region
      %s13 = ssub.s32 16, 16
      %14 = vsyncadd [#allocation3], %s13
      %s16 = sshll.u32 %s0, 4
      %s17 = int_to_ptr.vmem [resolvable:$true] %s16
      %19 = dma.vmem_to_smem %s17, 16, [#allocation2], [#allocation3]
    $region5: #{tmf_fast_forward.1} parent=1 // pred_fallthru
      _
    // Predicated region
    $region6: #{tmf_fast_forward.1} parent=1 // pred_check
      _
    $region7: #{tmf_fast_forward.1} parent=1 // pred_check_branch
      %21 = sbr.rel (0) target = $region9
    $region8: #{tmf_fast_forward.1} parent=1 // pred_region
      _
    $region9: #{tmf_fast_forward.1} parent=1 // pred_fallthru
      _
    // Predicated region
    $region10: #{tmf_fast_forward.1} parent=1 // pred_check
      _
    $region11: #{tmf_fast_forward.1} parent=1 // pred_check_branch
      %23 = sbr.rel (0) target = $region13
    $region12: #{tmf_fast_forward.1} parent=1 // pred_region
      _
    $region13: #{tmf_fast_forward.1} parent=1 // pred_fallthru
      _
    // Predicated region
    $region14: #{tmf_fast_forward.1} parent=1 // pred_check
      _
    $region15: #{tmf_fast_forward.1} parent=1 // pred_check_branch
      %25 = sbr.rel (0) target = $region17
    $region16: #{tmf_fast_forward.1} parent=1 // pred_region
      _
    $region17: #{tmf_fast_forward.1} parent=1 // pred_fallthru
      _
    // Predicated region
    $region18: #{tmf_fast_forward.1} parent=1 // pred_check
      _
    $region19: #{tmf_fast_forward.1} parent=1 // pred_check_branch
      %27 = sbr.rel (0) target = $region21
    $region20: #{tmf_fast_forward.1} parent=1 // pred_region
      %28 = dma.done [#allocation3], 16
    $region21: #{tmf_fast_forward.1} parent=1 // pred_fallthru
      _
    %29 = sfence
    %v30 = vld [vmem:[%s1] sm:$0xff]
    %v31 = vld [vmem:[%s1 + $0x8] sm:$0xff]
    %v32 = vld [vmem:[%s1 + $0x10] sm:$0xff]
    %v33 = vld [vmem:[%s1 + $0x18] sm:$0xff]
    %v34 = vld [vmem:[%s1 + $0x20] sm:$0xff]
    %v35 = vld [vmem:[%s1 + $0x28] sm:$0xff]
    %v36 = vld [vmem:[%s1 + $0x30] sm:$0xff]
    %v37 = vld [vmem:[%s1 + $0x38] sm:$0xff]
    %v38 = vld [vmem:[%s1 + $0x40] sm:$0xff]
    %v39 = vld [vmem:[%s1 + $0x48] sm:$0xff]
    %v40 = vld [vmem:[%s1 + $0x50] sm:$0xff]
    %v41 = vld [vmem:[%s1 + $0x58] sm:$0xff]
    %v42 = vld [vmem:[%s1 + $0x60] sm:$0xff]
    %v43 = vld [vmem:[%s1 + $0x68] sm:$0xff]
    %v44 = vld [vmem:[%s1 + $0x70] sm:$0xff]
    %v45 = vld [vmem:[%s1 + $0x78] sm:$0xff]
    %v46 = vld [vmem:[%s2] sm:$0xff]
    %v47 = vld [vmem:[%s2 + $0x8] sm:$0xff]
    %v48 = vld [vmem:[%s2 + $0x10] sm:$0xff]
    %v49 = vld [vmem:[%s2 + $0x18] sm:$0xff]
    %v50 = vld [vmem:[%s2 + $0x20] sm:$0xff]
    %v51 = vld [vmem:[%s2 + $0x28] sm:$0xff]
    %v52 = vld [vmem:[%s2 + $0x30] sm:$0xff]
    %v53 = vld [vmem:[%s2 + $0x38] sm:$0xff]
    %v54 = vld [vmem:[%s2 + $0x40] sm:$0xff]
    %v55 = vld [vmem:[%s2 + $0x48] sm:$0xff]
    %v56 = vld [vmem:[%s2 + $0x50] sm:$0xff]
    %v57 = vld [vmem:[%s2 + $0x58] sm:$0xff]
    %v58 = vld [vmem:[%s2 + $0x60] sm:$0xff]
    %v59 = vld [vmem:[%s2 + $0x68] sm:$0xff]
    %v60 = vld [vmem:[%s2 + $0x70] sm:$0xff]
    %v61 = vld [vmem:[%s2 + $0x78] sm:$0xff]
    %v62 = vmul.f32 %v30, %v46
    %v63 = vmul.f32 %v31, %v47
    %v64 = vmul.f32 %v32, %v48
    %v65 = vmul.f32 %v33, %v49
    %v66 = vmul.f32 %v34, %v50
    %v67 = vmul.f32 %v35, %v51
    %v68 = vmul.f32 %v36, %v52
    %v69 = vmul.f32 %v37, %v53
    %v70 = vmul.f32 %v38, %v54
    %v71 = vmul.f32 %v39, %v55
    %v72 = vmul.f32 %v40, %v56
    %v73 = vmul.f32 %v41, %v57
    %v74 = vmul.f32 %v42, %v58
    %v75 = vmul.f32 %v43, %v59
    %v76 = vmul.f32 %v44, %v60
    %v77 = vmul.f32 %v45, %v61
    %vm78 = vcmask 261120
    %v79 = vsel %vm78, %v62, 0.0
    %80 = vadd.xlane.f32.xlu0 %v79
    %v81 = vpop.xlane.xlu0 %80
    %v82 = vsel %vm78, %v63, 0.0
    %83 = vadd.xlane.f32.xlu0 %v82
    %v84 = vpop.xlane.xlu0 %83
    %v85 = vsel %vm78, %v64, 0.0
    %86 = vadd.xlane.f32.xlu0 %v85
    %v87 = vpop.xlane.xlu0 %86
    %v88 = vsel %vm78, %v65, 0.0
    %89 = vadd.xlane.f32.xlu0 %v88
    %v90 = vpop.xlane.xlu0 %89
    %v91 = vsel %vm78, %v66, 0.0
    %92 = vadd.xlane.f32.xlu0 %v91
    %v93 = vpop.xlane.xlu0 %92
    %v94 = vsel %vm78, %v67, 0.0
    %95 = vadd.xlane.f32.xlu0 %v94
    %v96 = vpop.xlane.xlu0 %95
    %v97 = vsel %vm78, %v68, 0.0
    %98 = vadd.xlane.f32.xlu0 %v97
    %v99 = vpop.xlane.xlu0 %98
    %v100 = vsel %vm78, %v69, 0.0
    %101 = vadd.xlane.f32.xlu0 %v100
    %v102 = vpop.xlane.xlu0 %101
    %v103 = vsel %vm78, %v70, 0.0
    %104 = vadd.xlane.f32.xlu0 %v103
    %v105 = vpop.xlane.xlu0 %104
    %v106 = vsel %vm78, %v71, 0.0
    %107 = vadd.xlane.f32.xlu0 %v106
    %v108 = vpop.xlane.xlu0 %107
    %v109 = vsel %vm78, %v72, 0.0
    %110 = vadd.xlane.f32.xlu0 %v109
    %v111 = vpop.xlane.xlu0 %110
    %v112 = vsel %vm78, %v73, 0.0
    %113 = vadd.xlane.f32.xlu0 %v112
    %v114 = vpop.xlane.xlu0 %113
    %v115 = vsel %vm78, %v74, 0.0
    %116 = vadd.xlane.f32.xlu0 %v115
    %v117 = vpop.xlane.xlu0 %116
    %v118 = vsel %vm78, %v75, 0.0
    %119 = vadd.xlane.f32.xlu0 %v118
    %v120 = vpop.xlane.xlu0 %119
    %v121 = vsel %vm78, %v76, 0.0
    %122 = vadd.xlane.f32.xlu0 %v121
    %v123 = vpop.xlane.xlu0 %122
    %v124 = vsel %vm78, %v77, 0.0
    %125 = vadd.xlane.f32.xlu0 %v124
    %v126 = vpop.xlane.xlu0 %125
    %s127 = sld [smem:[#allocation2]]
    %v128 = vld [vmem:[%s3] sm:$0xff]
    %v129 = vld [vmem:[%s3 + $0x8] sm:$0xff]
    %v130 = vld [vmem:[%s3 + $0x10] sm:$0xff]
    %v131 = vld [vmem:[%s3 + $0x18] sm:$0xff]
    %v132 = vld [vmem:[%s3 + $0x20] sm:$0xff]
    %v133 = vld [vmem:[%s3 + $0x28] sm:$0xff]
    %v134 = vld [vmem:[%s3 + $0x30] sm:$0xff]
    %v135 = vld [vmem:[%s3 + $0x38] sm:$0xff]
    %v136 = vld [vmem:[%s3 + $0x40] sm:$0xff]
    %v137 = vld [vmem:[%s3 + $0x48] sm:$0xff]
    %v138 = vld [vmem:[%s3 + $0x50] sm:$0xff]
    %v139 = vld [vmem:[%s3 + $0x58] sm:$0xff]
    %v140 = vld [vmem:[%s3 + $0x60] sm:$0xff]
    %v141 = vld [vmem:[%s3 + $0x68] sm:$0xff]
    %v142 = vld [vmem:[%s3 + $0x70] sm:$0xff]
    %v143 = vld [vmem:[%s3 + $0x78] sm:$0xff]
    %v144 = vmul.f32 %v81, %v128
    %v145 = vmul.f32 %v84, %v129
    %v146 = vmul.f32 %v87, %v130
    %v147 = vmul.f32 %v90, %v131
    %v148 = vmul.f32 %v93, %v132
    %v149 = vmul.f32 %v96, %v133
    %v150 = vmul.f32 %v99, %v134
    %v151 = vmul.f32 %v102, %v135
    %v152 = vmul.f32 %v105, %v136
    %v153 = vmul.f32 %v108, %v137
    %v154 = vmul.f32 %v111, %v138
    %v155 = vmul.f32 %v114, %v139
    %v156 = vmul.f32 %v117, %v140
    %v157 = vmul.f32 %v120, %v141
    %v158 = vmul.f32 %v123, %v142
    %v159 = vmul.f32 %v126, %v143
    %v160 = vstv %s127
    %v161 = vmul.f32 %v160, %v144
    %v162 = vmul.f32 %v160, %v145
    %v163 = vmul.f32 %v160, %v146
    %v164 = vmul.f32 %v160, %v147
    %v165 = vmul.f32 %v160, %v148
    %v166 = vmul.f32 %v160, %v149
    %v167 = vmul.f32 %v160, %v150
    %v168 = vmul.f32 %v160, %v151
    %v169 = vmul.f32 %v160, %v152
    %v170 = vmul.f32 %v160, %v153
    %v171 = vmul.f32 %v160, %v154
    %v172 = vmul.f32 %v160, %v155
    %v173 = vmul.f32 %v160, %v156
    %v174 = vmul.f32 %v160, %v157
    %v175 = vmul.f32 %v160, %v158
    %v176 = vmul.f32 %v160, %v159
    %s177 = sld [smem:[#allocation2 + $0x1]]
    %v178 = vstv %s177
    %v179 = vadd.f32 %v161, %v178
    %v180 = vadd.f32 %v162, %v178
    %v181 = vadd.f32 %v163, %v178
    %v182 = vadd.f32 %v164, %v178
    %v183 = vadd.f32 %v165, %v178
    %v184 = vadd.f32 %v166, %v178
    %v185 = vadd.f32 %v167, %v178
    %v186 = vadd.f32 %v168, %v178
    %v187 = vadd.f32 %v169, %v178
    %v188 = vadd.f32 %v170, %v178
    %v189 = vadd.f32 %v171, %v178
    %v190 = vadd.f32 %v172, %v178
    %v191 = vadd.f32 %v173, %v178
    %v192 = vadd.f32 %v174, %v178
    %v193 = vadd.f32 %v175, %v178
    %v194 = vadd.f32 %v176, %v178
    %v195 = vxor.u32 %v179, 2147483648
    %v196 = vxor.u32 %v180, 2147483648
    %v197 = vxor.u32 %v181, 2147483648
    %v198 = vxor.u32 %v182, 2147483648
    %v199 = vxor.u32 %v183, 2147483648
    %v200 = vxor.u32 %v184, 2147483648
    %v201 = vxor.u32 %v185, 2147483648
    %v202 = vxor.u32 %v186, 2147483648
    %v203 = vxor.u32 %v187, 2147483648
    %v204 = vxor.u32 %v188, 2147483648
    %v205 = vxor.u32 %v189, 2147483648
    %v206 = vxor.u32 %v190, 2147483648
    %v207 = vxor.u32 %v191, 2147483648
    %v208 = vxor.u32 %v192, 2147483648
    %v209 = vxor.u32 %v193, 2147483648
    %v210 = vxor.u32 %v194, 2147483648
    %v211 = vmul.f32 %v195, 1.442695
    %v212 = vpow.pop %v211
    %v213 = vmul.f32 %v196, 1.442695
    %v214 = vpow.pop %v213
    %v215 = vmul.f32 %v197, 1.442695
    %v216 = vpow.pop %v215
    %v217 = vmul.f32 %v198, 1.442695
    %v218 = vpow.pop %v217
    %v219 = vmul.f32 %v199, 1.442695
    %v220 = vpow.pop %v219
    %v221 = vmul.f32 %v200, 1.442695
    %v222 = vpow.pop %v221
    %v223 = vmul.f32 %v201, 1.442695
    %v224 = vpow.pop %v223
    %v225 = vmul.f32 %v202, 1.442695
    %v226 = vpow.pop %v225
    %v227 = vmul.f32 %v203, 1.442695
    %v228 = vpow.pop %v227
    %v229 = vmul.f32 %v204, 1.442695
    %v230 = vpow.pop %v229
    %v231 = vmul.f32 %v205, 1.442695
    %v232 = vpow.pop %v231
    %v233 = vmul.f32 %v206, 1.442695
    %v234 = vpow.pop %v233
    %v235 = vmul.f32 %v207, 1.442695
    %v236 = vpow.pop %v235
    %v237 = vmul.f32 %v208, 1.442695
    %v238 = vpow.pop %v237
    %v239 = vmul.f32 %v209, 1.442695
    %v240 = vpow.pop %v239
    %v241 = vmul.f32 %v210, 1.442695
    %v242 = vpow.pop %v241
    %v243 = vadd.f32 %v212, 1.0
    %v244 = vadd.f32 %v214, 1.0
    %v245 = vadd.f32 %v216, 1.0
    %v246 = vadd.f32 %v218, 1.0
    %v247 = vadd.f32 %v220, 1.0
    %v248 = vadd.f32 %v222, 1.0
    %v249 = vadd.f32 %v224, 1.0
    %v250 = vadd.f32 %v226, 1.0
    %v251 = vadd.f32 %v228, 1.0
    %v252 = vadd.f32 %v230, 1.0
    %v253 = vadd.f32 %v232, 1.0
    %v254 = vadd.f32 %v234, 1.0
    %v255 = vadd.f32 %v236, 1.0
    %v256 = vadd.f32 %v238, 1.0
    %v257 = vadd.f32 %v240, 1.0
    %v258 = vadd.f32 %v242, 1.0
    %v259 = vrcp.pop %v243
    %v260 = vmul.f32 1.0, %v259
    %v261 = vrcp.pop %v244
    %v262 = vmul.f32 1.0, %v261
    %v263 = vrcp.pop %v245
    %v264 = vmul.f32 1.0, %v263
    %v265 = vrcp.pop %v246
    %v266 = vmul.f32 1.0, %v265
    %v267 = vrcp.pop %v247
    %v268 = vmul.f32 1.0, %v267
    %v269 = vrcp.pop %v248
    %v270 = vmul.f32 1.0, %v269
    %v271 = vrcp.pop %v249
    %v272 = vmul.f32 1.0, %v271
    %v273 = vrcp.pop %v250
    %v274 = vmul.f32 1.0, %v273
    %v275 = vrcp.pop %v251
    %v276 = vmul.f32 1.0, %v275
    %v277 = vrcp.pop %v252
    %v278 = vmul.f32 1.0, %v277
    %v279 = vrcp.pop %v253
    %v280 = vmul.f32 1.0, %v279
    %v281 = vrcp.pop %v254
    %v282 = vmul.f32 1.0, %v281
    %v283 = vrcp.pop %v255
    %v284 = vmul.f32 1.0, %v283
    %v285 = vrcp.pop %v256
    %v286 = vmul.f32 1.0, %v285
    %v287 = vrcp.pop %v257
    %v288 = vmul.f32 1.0, %v287
    %v289 = vrcp.pop %v258
    %v290 = vmul.f32 1.0, %v289
    %vm291 = vcmask 7168
    %292 = vst.msk [vmem:[%s4] sm:$0xff] %vm291, %v260
    %293 = vst.msk [vmem:[%s4 + $0x8] sm:$0xff] %vm291, %v262
    %294 = vst.msk [vmem:[%s4 + $0x10] sm:$0xff] %vm291, %v264
    %295 = vst.msk [vmem:[%s4 + $0x18] sm:$0xff] %vm291, %v266
    %296 = vst.msk [vmem:[%s4 + $0x20] sm:$0xff] %vm291, %v268
    %297 = vst.msk [vmem:[%s4 + $0x28] sm:$0xff] %vm291, %v270
    %298 = vst.msk [vmem:[%s4 + $0x30] sm:$0xff] %vm291, %v272
    %299 = vst.msk [vmem:[%s4 + $0x38] sm:$0xff] %vm291, %v274
    %300 = vst.msk [vmem:[%s4 + $0x40] sm:$0xff] %vm291, %v276
    %301 = vst.msk [vmem:[%s4 + $0x48] sm:$0xff] %vm291, %v278
    %302 = vst.msk [vmem:[%s4 + $0x50] sm:$0xff] %vm291, %v280
    %303 = vst.msk [vmem:[%s4 + $0x58] sm:$0xff] %vm291, %v282
    %304 = vst.msk [vmem:[%s4 + $0x60] sm:$0xff] %vm291, %v284
    %305 = vst.msk [vmem:[%s4 + $0x68] sm:$0xff] %vm291, %v286
    %306 = vst.msk [vmem:[%s4 + $0x70] sm:$0xff] %vm291, %v288
    %307 = vst.msk [vmem:[%s4 + $0x78] sm:$0xff] %vm291, %v290
    // Predicated region
    $region22: #{tmf_fast_forward.1} parent=1 // pred_check
      _
    $region23: #{tmf_fast_forward.1} parent=1 // pred_check_branch
      %309 = sbr.rel (0) target = $region25
    $region24: #{tmf_fast_forward.1} parent=1 // pred_region
      _
    $region25: #{tmf_fast_forward.1} parent=1 // pred_fallthru
      _
    // Predicated region
    $region26: #{tmf_fast_forward.1} parent=1 // pred_check
      _
    $region27: #{tmf_fast_forward.1} parent=1 // pred_check_branch
      %311 = sbr.rel (0) target = $region29
    $region28: #{tmf_fast_forward.1} parent=1 // pred_region
      _
    $region29: #{tmf_fast_forward.1} parent=1 // pred_fallthru
      _
    %312 = vsyncpa [#allocation3], 1

</llo_original>
